<compile_context>
chip_gen: v5e
topology: v5e:2x2
jax: 0.10.0
libtpu: 0.0.40
codegen_flags: <defaults>
</compile_context>

<pallas_src>
import functools

import jax
import jax.numpy as jnp
from jax.experimental import pallas as pl
from jax.experimental.pallas import tpu as pltpu

_BN_EPS = 1e-5


def _fc_block_kernel(x_ref, w_ref, gamma_ref, beta_ref, o_ref, acc_ref, *,
                     batch, tk, x_resident, gelu_tanh):
    k = pl.program_id(1)

    @pl.when(k == 0)
    def _init():
        acc_ref[...] = jnp.zeros_like(acc_ref)

    # --- Linear (bias cancels under batch-stat BN): accumulate x @ W ---------
    if x_resident:
        start = pl.multiple_of(k * tk, 128)
        x = x_ref[:, pl.ds(start, tk)]
    else:
        x = x_ref[...]
    acc_ref[...] += jnp.dot(x, w_ref[...], preferred_element_type=jnp.float32)

    @pl.when(k == pl.num_programs(1) - 1)
    def _finalize():
        y = acc_ref[...]                                    # (Bp, TN) f32
        inv_b = jnp.float32(1.0 / batch)                    # true batch size

        # --- BatchNorm1d (training-mode stats, biased variance) -------------
        mean = jnp.sum(y, axis=0, keepdims=True) * inv_b    # pad rows are 0
        yc = y - mean
        if y.shape[0] != batch:                             # mask padded rows
            row = jax.lax.broadcasted_iota(jnp.int32, y.shape, 0)
            yc = jnp.where(row < batch, yc, 0.0)
        var = jnp.sum(yc * yc, axis=0, keepdims=True) * inv_b
        scale = gamma_ref[...] * jax.lax.rsqrt(var + _BN_EPS)   # (1, TN)
        z = yc * scale + beta_ref[...]                          # 2 ops / elem

        # --- GELU ------------------------------------------------------------
        if gelu_tanh:   # tanh approx -> EUP slot (opt-in; not bit-exact)
            o_ref[...] = jax.nn.gelu(z, approximate=True).astype(o_ref.dtype)
        else:           # exact erf (nn.GELU default)
            inv_sqrt2 = 0.7071067811865475
            o_ref[...] = (0.5 * z * (1.0 + jax.lax.erf(z * inv_sqrt2))).astype(o_ref.dtype)


def _round_up(n, m):
    return ((n + m - 1) // m) * m


def _cdiv(a, b):
    return -(-a // b)


def _tiles_for(extent128, n_tiles):
    """Smallest 128-multiple tile covering a 128-aligned extent with ~n_tiles tiles."""
    units = extent128 // 128
    n_tiles = min(max(int(n_tiles), 1), units)
    tu = _cdiv(units, n_tiles)
    n = _cdiv(units, tu)
    return tu * 128, tu * 128 * n, n


def _vmem_bytes(Bp, Kp, tk, tn, x_resident, x_bytes, w_bytes):
    x_buf = 2 * Bp * (Kp if x_resident else tk) * x_bytes   # conservative 2x
    w_buf = 2 * tk * tn * w_bytes
    gb_buf = 2 * 2 * tn * 4
    out_buf = 2 * Bp * tn * 4
    acc = Bp * tn * 4
    return x_buf + w_buf + gb_buf + out_buf + acc


@functools.partial(jax.jit,
                   static_argnames=("use_bf16", "tile_n", "tile_k", "gelu_tanh"))
def fc_block(x, w, gamma, beta, *, use_bf16=False, tile_n=512, tile_k=512,
             gelu_tanh=False):
    """x: (B, in_feats); w: (in_feats, out_feats); gamma/beta: (1, out_feats).

    No Linear-bias argument: it cancels exactly under training-mode BN.
    use_bf16 streams x/w from HBM in bf16 (f32 accumulation) for BW-bound shapes.
    """
    B, in_feats = x.shape
    out_feats = w.shape[1]

    # ----- device-aware VMEM cap ---------------------------------------------
    try:
        dev_vmem = int(getattr(pltpu.get_tpu_info(), "vmem_capacity_bytes", 64 << 20))
    except Exception:  # pragma: no cover - conservative fallback
        dev_vmem = 64 << 20
    vmem_cap = max(dev_vmem - (8 << 20), 16 << 20)
    budget = int(0.85 * vmem_cap)

    x_bytes = 2 if use_bf16 else 4
    w_bytes = 2 if use_bf16 else 4

    Bp = _round_up(B, 8)                    # clean (8,128) sublane tiling
    Kp128 = _round_up(in_feats, 128)
    Np128 = _round_up(out_feats, 128)

    # ----- N tiles: lane-dense output, >=2 tiles when possible (v7x megacore)
    nn_req = max(_cdiv(Np128, min(tile_n, Np128)), 2)
    tn, Np, n_n = _tiles_for(Np128, nn_req)

    # ----- K tiles: shrink tk first until the VMEM budget fits ---------------
    nk_req = _cdiv(Kp128, min(tile_k, Kp128))
    while True:
        tk, Kp, n_k = _tiles_for(Kp128, nk_req)
        x_resident = Bp * Kp * x_bytes <= (4 << 20)
        need = _vmem_bytes(Bp, Kp, tk, tn, x_resident, x_bytes, w_bytes)
        if need <= budget or tk == 128:
            break
        nk_req += 1
    # Only then narrow the output tile.
    while need > budget and tn > 128:
        nn_req += 1
        tn, Np, n_n = _tiles_for(Np128, nn_req)
        need = _vmem_bytes(Bp, Kp, tk, tn, x_resident, x_bytes, w_bytes)
    # TODO(synk): for training-size batches (B in the thousands) add a batch-tiled
    # two-pass BN path (per-feature sum/sumsq partials + normalize pass) so the
    # (B, tn) accumulator does not have to hold the whole batch.

    # ----- padding (zero rows/cols are exact no-ops for the math) ------------
    xp = x if (Kp == in_feats and Bp == B) else jnp.pad(
        x, ((0, Bp - B), (0, Kp - in_feats)))
    wp = w if (Kp == in_feats and Np == out_feats) else jnp.pad(
        w, ((0, Kp - in_feats), (0, Np - out_feats)))
    gp = gamma if Np == out_feats else jnp.pad(
        gamma, ((0, 0), (0, Np - out_feats)), constant_values=1.0)
    bp = beta if Np == out_feats else jnp.pad(beta, ((0, 0), (0, Np - out_feats)))
    if use_bf16:  # cast at the boundary: halves the HBM weight/activation stream
        xp = xp.astype(jnp.bfloat16)
        wp = wp.astype(jnp.bfloat16)

    grid = (n_n, n_k)  # (N parallel, K reduction last)

    if x_resident:
        x_spec = pl.BlockSpec((Bp, Kp), lambda j, k: (0, 0))   # fetched once
    else:
        x_spec = pl.BlockSpec((Bp, tk), lambda j, k: (0, k))

    cost = pl.CostEstimate(
        flops=2 * Bp * Kp * Np + 10 * Bp * Np,
        transcendentals=Bp * Np,
        bytes_accessed=(Bp * Kp * x_bytes + Kp * Np * w_bytes
                        + 2 * Np * 4 + Bp * Np * 4),
    )
    vmem_limit = int(min(max(int(1.25 * need), 16 << 20), vmem_cap))

    out = pl.pallas_call(
        functools.partial(_fc_block_kernel, batch=B, tk=tk,
                          x_resident=x_resident, gelu_tanh=gelu_tanh),
        out_shape=jax.ShapeDtypeStruct((Bp, Np), jnp.float32),
        grid=grid,
        in_specs=[
            x_spec,                                          # activations
            pl.BlockSpec((tk, tn), lambda j, k: (k, j)),     # weights
            pl.BlockSpec((1, tn), lambda j, k: (0, j)),      # gamma
            pl.BlockSpec((1, tn), lambda j, k: (0, j)),      # beta
        ],
        out_specs=pl.BlockSpec((Bp, tn), lambda j, k: (0, j)),
        scratch_shapes=[pltpu.VMEM((Bp, tn), jnp.float32)],  # resident f32 acc
        compiler_params=pltpu.CompilerParams(
            dimension_semantics=("parallel", "arbitrary"),
            vmem_limit_bytes=vmem_limit,
        ),
        cost_estimate=cost,
    )(xp, wp, gp, bp)

    return out[:B, :out_feats]


def init_params(key, in_feats, out_feats):
    """Deterministic init mirroring PyTorch defaults."""
    k_w, k_b = jax.random.split(key)
    bound = 1.0 / jnp.sqrt(jnp.float32(in_feats))
    # PyTorch Linear: weight (out, in) ~ U(-bound, bound); stored transposed (in, out).
    w = jax.random.uniform(k_w, (in_feats, out_feats), jnp.float32, -bound, bound)
    b = jax.random.uniform(k_b, (1, out_feats), jnp.float32, -bound, bound)
    # BatchNorm1d affine params: weight=1, bias=0.
    gamma = jnp.ones((1, out_feats), jnp.float32)
    beta = jnp.zeros((1, out_feats), jnp.float32)
    return w, b, gamma, beta


def _reference(x, w, b, gamma, beta):
    # Includes the Linear bias to demonstrate it cancels under batch-stat BN.
    y = x @ w + b
    mean = jnp.mean(y, axis=0, keepdims=True)
    var = jnp.mean((y - mean) ** 2, axis=0, keepdims=True)
    z = gamma * (y - mean) * jax.lax.rsqrt(var + _BN_EPS) + beta
    return 0.5 * z * (1.0 + jax.lax.erf(z / jnp.sqrt(2.0)))


if __name__ == "__main__":
    key = jax.random.PRNGKey(0)
    k_x, k_p = jax.random.split(key)

    B, in_feats, out_feats = 8, 32, 32
    x = jax.random.normal(k_x, (B, in_feats), jnp.float32)
    w, b, gamma, beta = init_params(k_p, in_feats, out_feats)

    out = fc_block(x, w, gamma, beta)   # bias intentionally not passed (cancels in BN)
    out = jax.block_until_ready(out)

    ref = _reference(x, w, b, gamma, beta)
    assert out.shape == (B, out_feats)
    assert jnp.allclose(out, ref, atol=1e-4, rtol=1e-4), "mismatch vs. reference"

    print("KERNEL_OK")
</pallas_src>

<mosaic_0001>
module attributes {stable_mosaic.version = 11 : i64} {
  func.func @_fc_block_kernel(%arg0: i32, %arg1: i32, %arg2: memref<8x128xf32, #tpu.memory_space<vmem>>, %arg3: memref<128x128xf32, #tpu.memory_space<vmem>>, %arg4: memref<1x128xf32, #tpu.memory_space<vmem>>, %arg5: memref<1x128xf32, #tpu.memory_space<vmem>>, %arg6: memref<8x128xf32, #tpu.memory_space<vmem>>, %arg7: memref<8x128xf32, #tpu.memory_space<vmem>>) attributes {dimension_semantics = [#tpu.dimension_semantics<parallel>, #tpu.dimension_semantics<arbitrary>], iteration_bounds = array<i64: 1, 1>, scalar_prefetch = 0 : i64, scratch_operands = 1 : i64, tpu.core_type = #tpu.core_type<tc>, window_params = [{pipeline_mode = #tpu.pipeline_mode<synchronous>, transform_indices = @transform_0, window_bounds = array<i64: 8, 128>}, {transform_indices = @transform_1, window_bounds = array<i64: 128, 128>}, {transform_indices = @transform_2, window_bounds = array<i64: 1, 128>}, {transform_indices = @transform_3, window_bounds = array<i64: 1, 128>}, {transform_indices = @transform_4, window_bounds = array<i64: 8, 128>}]} {
    %c0_i32 = arith.constant 0 : i32
    %0 = arith.cmpi eq, %arg1, %c0_i32 : i32
    %1 = arith.extui %0 : i1 to i32
    %c0_i32_0 = arith.constant 0 : i32
    %2 = arith.cmpi ne, %1, %c0_i32_0 : i32
    scf.if %2 {
      %cst_9 = arith.constant 0.000000e+00 : f32
      %15 = vector.broadcast %cst_9 : f32 to vector<8x128xf32>
      %c0_10 = arith.constant 0 : index
      %c0_11 = arith.constant 0 : index
      %16 = vector.load %arg7[%c0_10, %c0_11] : memref<8x128xf32, #tpu.memory_space<vmem>>, vector<8x128xf32>
      tpu.vector_store %arg7[%c0_10, %c0_11], %15 {strides = array<i32>} : memref<8x128xf32, #tpu.memory_space<vmem>>, vector<8x128xf32>,
    } else {
    }
    %c128_i32 = arith.constant 128 : i32
    %3 = arith.muli %arg1, %c128_i32 : i32
    %4 = tpu.assume_multiple %3, 128 : i32
    %c0 = arith.constant 0 : index
    %5 = arith.index_cast %4 : i32 to index
    %6 = vector.load %arg2[%c0, %5] : memref<8x128xf32, #tpu.memory_space<vmem>>, vector<8x128xf32>
    %c0_1 = arith.constant 0 : index
    %c0_2 = arith.constant 0 : index
    %7 = vector.load %arg7[%c0_1, %c0_2] : memref<8x128xf32, #tpu.memory_space<vmem>>, vector<8x128xf32>
    %c0_3 = arith.constant 0 : index
    %c0_4 = arith.constant 0 : index
    %8 = vector.load %arg3[%c0_3, %c0_4] : memref<128x128xf32, #tpu.memory_space<vmem>>, vector<128x128xf32>
    %cst = arith.constant dense<0.000000e+00> : vector<8x128xf32>
    %9 = tpu.matmul %6, %8, %cst {dimension_numbers = #tpu.dot_dimension_numbers<[1], [0], [0], [1], [0, 0, 1, 1], [], []>} : vector<8x128xf32>, vector<128x128xf32>, vector<8x128xf32> -> vector<8x128xf32>
    %10 = arith.addf %7, %9 : vector<8x128xf32>
    %c0_5 = arith.constant 0 : index
    %c0_6 = arith.constant 0 : index
    %11 = vector.load %arg7[%c0_5, %c0_6] : memref<8x128xf32, #tpu.memory_space<vmem>>, vector<8x128xf32>
    tpu.vector_store %arg7[%c0_5, %c0_6], %10 {strides = array<i32>} : memref<8x128xf32, #tpu.memory_space<vmem>>, vector<8x128xf32>,
    %c0_i32_7 = arith.constant 0 : i32
    %12 = arith.cmpi eq, %arg1, %c0_i32_7 : i32
    %13 = arith.extui %12 : i1 to i32
    %c0_i32_8 = arith.constant 0 : i32
    %14 = arith.cmpi ne, %13, %c0_i32_8 : i32
    scf.if %14 {
      %c0_9 = arith.constant 0 : index
      %c0_10 = arith.constant 0 : index
      %15 = vector.load %arg7[%c0_9, %c0_10] : memref<8x128xf32, #tpu.memory_space<vmem>>, vector<8x128xf32>
      %cst_11 = arith.constant dense<0.000000e+00> : vector<128xf32>
      %16 = vector.multi_reduction <add>, %15, %cst_11 [0] : vector<8x128xf32> to vector<128xf32>
      %17 = vector.shape_cast %16 : vector<128xf32> to vector<1x128xf32>
      %cst_12 = arith.constant 1.250000e-01 : f32
      %18 = vector.broadcast %cst_12 : f32 to vector<1x128xf32>
      %19 = arith.mulf %17, %18 : vector<1x128xf32>
      %20 = vector.broadcast %19 : vector<1x128xf32> to vector<8x128xf32>
      %21 = arith.subf %15, %20 : vector<8x128xf32>
      %22 = arith.mulf %21, %21 : vector<8x128xf32>
      %cst_13 = arith.constant dense<0.000000e+00> : vector<128xf32>
      %23 = vector.multi_reduction <add>, %22, %cst_13 [0] : vector<8x128xf32> to vector<128xf32>
      %24 = vector.shape_cast %23 : vector<128xf32> to vector<1x128xf32>
      %cst_14 = arith.constant 1.250000e-01 : f32
      %25 = vector.broadcast %cst_14 : f32 to vector<1x128xf32>
      %26 = arith.mulf %24, %25 : vector<1x128xf32>
      %c0_15 = arith.constant 0 : index
      %c0_16 = arith.constant 0 : index
      %27 = vector.load %arg4[%c0_15, %c0_16] : memref<1x128xf32, #tpu.memory_space<vmem>>, vector<1x128xf32>
      %cst_17 = arith.constant 9.99999974E-6 : f32
      %28 = vector.broadcast %cst_17 : f32 to vector<1x128xf32>
      %29 = arith.addf %26, %28 : vector<1x128xf32>
      %30 = math.rsqrt %29 : vector<1x128xf32>
      %31 = arith.mulf %27, %30 : vector<1x128xf32>
      %32 = vector.broadcast %31 : vector<1x128xf32> to vector<8x128xf32>
      %33 = arith.mulf %21, %32 : vector<8x128xf32>
      %c0_18 = arith.constant 0 : index
      %c0_19 = arith.constant 0 : index
      %34 = vector.load %arg5[%c0_18, %c0_19] : memref<1x128xf32, #tpu.memory_space<vmem>>, vector<1x128xf32>
      %35 = vector.broadcast %34 : vector<1x128xf32> to vector<8x128xf32>
      %36 = arith.addf %33, %35 : vector<8x128xf32>
      %cst_20 = arith.constant 5.000000e-01 : f32
      %37 = vector.broadcast %cst_20 : f32 to vector<8x128xf32>
      %38 = arith.mulf %37, %36 : vector<8x128xf32>
      %cst_21 = arith.constant 0.707106769 : f32
      %39 = vector.broadcast %cst_21 : f32 to vector<8x128xf32>
      %40 = arith.mulf %36, %39 : vector<8x128xf32>
      %41 = math.erf %40 : vector<8x128xf32>
      %cst_22 = arith.constant 1.000000e+00 : f32
      %42 = vector.broadcast %cst_22 : f32 to vector<8x128xf32>
      %43 = arith.addf %42, %41 : vector<8x128xf32>
      %44 = arith.mulf %38, %43 : vector<8x128xf32>
      %c0_23 = arith.constant 0 : index
      %c0_24 = arith.constant 0 : index
      %45 = vector.load %arg6[%c0_23, %c0_24] : memref<8x128xf32, #tpu.memory_space<vmem>>, vector<8x128xf32>
      tpu.vector_store %arg6[%c0_23, %c0_24], %44 {strides = array<i32>} : memref<8x128xf32, #tpu.memory_space<vmem>>, vector<8x128xf32>,
    } else {
    }
    return
  }
  func.func @transform_0(%arg0: i32, %arg1: i32) -> (i32, i32) {
    %c0_i32 = arith.constant 0 : i32
    %c0_i32_0 = arith.constant 0 : i32
    %c0_i32_1 = arith.constant 0 : i32
    return %c0_i32, %c0_i32_0 : i32, i32
  }
  func.func @transform_1(%arg0: i32, %arg1: i32) -> (i32, i32) {
    %c0_i32 = arith.constant 0 : i32
    return %arg1, %arg0 : i32, i32
  }
  func.func @transform_2(%arg0: i32, %arg1: i32) -> (i32, i32) {
    %c0_i32 = arith.constant 0 : i32
    %c0_i32_0 = arith.constant 0 : i32
    return %c0_i32, %arg0 : i32, i32
  }
  func.func @transform_3(%arg0: i32, %arg1: i32) -> (i32, i32) {
    %c0_i32 = arith.constant 0 : i32
    %c0_i32_0 = arith.constant 0 : i32
    return %c0_i32, %arg0 : i32, i32
  }
  func.func @transform_4(%arg0: i32, %arg1: i32) -> (i32, i32) {
    %c0_i32 = arith.constant 0 : i32
    %c0_i32_0 = arith.constant 0 : i32
    return %c0_i32, %arg0 : i32, i32
  }
}

</mosaic_0001>

<llo_original>
// kernel: fc_block.1
$region0: #{fc_block.1}
  #allocation0 [shape = 'u32[]', space=smem, size = 0x4, offset = 0x4, fixed_abs, tag = 'smem constant byte address 0x4 - core index']
  #allocation1 [shape = 'u32[72,128]{1,0:T(1,128)}', space=vmem, size = 0x9000, scoped, tag = 'internal scratch']
  #allocation2 [shape = 'f32[8,128]{1,0:T(8,128)}', space=vmem, size = 0x1000, scoped, tag = 'scratch operand']
  %s0 = inlined_call_operand.vmem [shape: f32[8,128], index: 0, kind: input, shape index: {}]
  %s1 = inlined_call_operand.vmem [shape: f32[128,128], index: 1, kind: input, shape index: {}]
  %s2 = inlined_call_operand.vmem [shape: f32[1,128], index: 2, kind: input, shape index: {}]
  %s3 = inlined_call_operand.vmem [shape: f32[1,128], index: 3, kind: input, shape index: {}]
  %s4 = inlined_call_operand.hbm [shape: f32[8,128], index: 4, kind: output, shape index: {}]
  %s5 = sld [smem:[#allocation0]]
  $region34: #{fc_block.1} parent=0
    _
  %s7 = ssub.s32 1, %s5
  %s8 = scalar_select 0, %s7, %s5
  $region1: #{fc_block.1} parent=0
    #allocation3 [shape = 'u8[4096]{0}', space=vmem, size = 0x1000, scoped, tag = 'output window, operand 0, single buffered']
    #allocation4 [shape = 's32[1]{0}', space=sflag, size = 0x4, scoped, tag = 'scoped memory for fc_block.1']
    %9 = vsyncpa [#allocation4], 0
    // Predicated region
    $region2: #{fc_block.1} parent=1 // pred_check
      _
    $region3: #{fc_block.1} parent=1 // pred_check_branch
      %11 = sbr.rel (0) target = $region5
    $region4: #{fc_block.1} parent=1 // pred_region
      _
    $region5: #{fc_block.1} parent=1 // pred_fallthru
      _
    // Predicated region
    $region6: #{fc_block.1} parent=1 // pred_check
      _
    $region7: #{fc_block.1} parent=1 // pred_check_branch
      %13 = sbr.rel (0) target = $region9
    $region8: #{fc_block.1} parent=1 // pred_region
      _
    $region9: #{fc_block.1} parent=1 // pred_fallthru
      _
    // Predicated region
    $region10: #{fc_block.1} parent=1 // pred_check
      _
    $region11: #{fc_block.1} parent=1 // pred_check_branch
      %15 = sbr.rel (0) target = $region13
    $region12: #{fc_block.1} parent=1 // pred_region
      _
    $region13: #{fc_block.1} parent=1 // pred_fallthru
      _
    // Predicated region
    $region14: #{fc_block.1} parent=1 // pred_check
      _
    $region15: #{fc_block.1} parent=1 // pred_check_branch
      %17 = sbr.rel (0) target = $region17
    $region16: #{fc_block.1} parent=1 // pred_region
      _
    $region17: #{fc_block.1} parent=1 // pred_fallthru
      _
    %p18 = scmp.eq.s32.totalorder 0, 0
    // Predicated region
    $region18: #{fc_block.1} parent=1 // pred_check
      %p19 = pneg %p18
    $region19: #{fc_block.1} parent=1 // pred_check_branch
      %21 = sbr.rel (%p19) target = $region21
    $region20: #{fc_block.1} parent=1 // pred_region
      %22 = vst [vmem:[#allocation2] sm:$0xff] 0.0
    $region21: #{fc_block.1} parent=1 // pred_fallthru
      _
    %s23 = smul.u32 0, 128
    %s24 = sshra.s32 %s23, 7
    %s25 = sand.u32 %s23, 127
    %s26 = scalar_lea.vmem %s0, %s24
    %v27 = vld [vmem:[%s26] sm:$0xff]
    %v28 = vld [vmem:[#allocation2] sm:$0xff]
    %v29 = vld [vmem:[%s1] sm:$0xff]
    %v30 = vld [vmem:[%s1 + $0x8] sm:$0xff]
    %v31 = vld [vmem:[%s1 + $0x10] sm:$0xff]
    %v32 = vld [vmem:[%s1 + $0x18] sm:$0xff]
    %v33 = vld [vmem:[%s1 + $0x20] sm:$0xff]
    %v34 = vld [vmem:[%s1 + $0x28] sm:$0xff]
    %v35 = vld [vmem:[%s1 + $0x30] sm:$0xff]
    %v36 = vld [vmem:[%s1 + $0x38] sm:$0xff]
    %v37 = vld [vmem:[%s1 + $0x40] sm:$0xff]
    %v38 = vld [vmem:[%s1 + $0x48] sm:$0xff]
    %v39 = vld [vmem:[%s1 + $0x50] sm:$0xff]
    %v40 = vld [vmem:[%s1 + $0x58] sm:$0xff]
    %v41 = vld [vmem:[%s1 + $0x60] sm:$0xff]
    %v42 = vld [vmem:[%s1 + $0x68] sm:$0xff]
    %v43 = vld [vmem:[%s1 + $0x70] sm:$0xff]
    %v44 = vld [vmem:[%s1 + $0x78] sm:$0xff]
    %45 = vmatpush.msra.mxu0 %v44
    %46 = vmatpush.msra.mxu0 %v43
    %47 = vmatpush.msra.mxu0 %v42
    %48 = vmatpush.msra.mxu0 %v41
    %49 = vmatpush.msra.mxu0 %v40
    %50 = vmatpush.msra.mxu0 %v39
    %51 = vmatpush.msra.mxu0 %v38
    %52 = vmatpush.msra.mxu0 %v37
    %53 = vmatpush.msra.mxu0 %v36
    %54 = vmatpush.msra.mxu0 %v35
    %55 = vmatpush.msra.mxu0 %v34
    %56 = vmatpush.msra.mxu0 %v33
    %57 = vmatpush.msra.mxu0 %v32
    %58 = vmatpush.msra.mxu0 %v31
    %59 = vmatpush.msra.mxu0 %v30
    %60 = vmatpush.msra.mxu0 %v29
    %61 = vmatmul.f32.gmra.mxu0 %v27
    %v62 = vpop.f32.mrf.mxu0
    %v63 = vadd.f32 0.0, %v62
    %64 = vdwg.mxu0
    %v65 = vadd.f32 %v28, %v63
    %66 = vst [vmem:[#allocation2] sm:$0xff] %v65
    // Predicated region
    $region22: #{fc_block.1} parent=1 // pred_check
      %p67 = pneg %p18
    $region23: #{fc_block.1} parent=1 // pred_check_branch
      %69 = sbr.rel (%p67) target = $region25
    $region24: #{fc_block.1} parent=1 // pred_region
      %v70 = vld [vmem:[#allocation2] sm:$0xff]
      %v71 = vrot.slane %v70, 4
      %v72 = vadd.f32 %v70, %v71
      %v73 = vrot.slane %v72, 2
      %v74 = vadd.f32 %v72, %v73
      %v75 = vrot.slane %v74, 1
      %v76 = vadd.f32 %v74, %v75
      %v77 = vmul.f32 %v76, 0.125
      %v78 = vsub.f32 %v70, %v77
      %v79 = vmul.f32 %v78, %v78
      %v80 = vrot.slane %v79, 4
      %v81 = vadd.f32 %v79, %v80
      %v82 = vrot.slane %v81, 2
      %v83 = vadd.f32 %v81, %v82
      %v84 = vrot.slane %v83, 1
      %v85 = vadd.f32 %v83, %v84
      %v86 = vmul.f32 %v85, 0.125
      %v87 = vld [vmem:[%s2] sm:$0x1]
      %v88 = vadd.f32 %v86, 1e-05
      %v89 = vrsqrt.pop %v88
      %v90 = vmul.f32 %v89, %v88
      %v91 = vmul.f32 %v90, %v89
      %v92 = vmul.f32 0.5, %v91
      %v93 = vsub.f32 1.5, %v92
      %v94 = vmul.f32 %v89, %v93
      %vm95 = vweird.f32 %v88
      %vm96 = vweird.f32 %v89
      %vm97 = vmor %vm95, %vm96
      %v98 = vsel %vm97, %v89, %v94
      %v99 = vmul.f32 %v87, %v98
      %v101 = vperm.slane %v99, 0
      %v103 = vmul.f32 %v78, %v101
      %v104 = vld [vmem:[%s3] sm:$0x1]
      %v106 = vperm.slane %v104, 0
      %v108 = vadd.f32 %v103, %v106
      %v109 = vmul.f32 %v108, 0.5
      %v110 = vmul.f32 %v108, 0.70710677
      %v111 = vmul.f32 %v110, %v110
      %v112 = vmin.f32 16.0, %v111
      %v113 = vmul.f32 %v112, 2.1237322e-06
      %v114 = vadd.f32 %v113, 0.00028619796
      %v115 = vmul.f32 %v112, %v114
      %v116 = vadd.f32 %v115, 0.0036580483
      %v117 = vmul.f32 %v112, %v116
      %v118 = vadd.f32 %v117, 0.05243302
      %v119 = vmul.f32 %v112, %v118
      %v120 = vadd.f32 %v119, 0.18741608
      %v121 = vmul.f32 %v112, %v120
      %v122 = vadd.f32 %v121, 1.1283791
      %v123 = vmul.f32 %v110, %v122
      %v124 = vmul.f32 %v112, 3.8918573e-05
      %v125 = vadd.f32 %v124, 0.001143296
      %v126 = vmul.f32 %v112, %v125
      %v127 = vadd.f32 %v126, 0.014752088
      %v128 = vmul.f32 %v112, %v127
      %v129 = vadd.f32 %v128, 0.112945676
      %v130 = vmul.f32 %v112, %v129
      %v131 = vadd.f32 %v130, 0.4994258
      %v132 = vmul.f32 %v112, %v131
      %v133 = vadd.f32 %v132, 1.0
      %v134 = vrcp.pop %v133
      %v135 = vmul.f32 %v133, %v134
      %v136 = vsub.f32 1.0, %v135
      %v137 = vmul.f32 %v134, %v136
      %v138 = vadd.f32 %v134, %v137
      %vm139 = vweird.f32 %v133
      %vm140 = vweird.f32 %v134
      %vm141 = vmor %vm139, %vm140
      %v142 = vsel %vm141, %v134, %v138
      %v143 = vand.u32 2147483647, %v133
      %vm144 = vcmp.eq.f32.partialorder %v143, 8.507059e+37
      %v145 = vand.u32 %v133, 2147483648
      %v146 = vor.u32 1.1754944e-38, %v145
      %v147 = vsel %vm144, %v146, %v142
      %v148 = vmul.f32 %v123, %v147
      %v149 = vmin.f32 %v148, 1.0
      %v150 = vmax.f32 %v149, -1.0
      %v151 = vadd.f32 %v150, 1.0
      %v152 = vmul.f32 %v109, %v151
      %153 = vst [vmem:[#allocation3] sm:$0xff] %v152
    $region25: #{fc_block.1} parent=1 // pred_fallthru
      _
    // Predicated region
    $region26: #{fc_block.1} parent=1 // pred_check
      _
    $region27: #{fc_block.1} parent=1 // pred_check_branch
      %155 = sbr.rel (0) target = $region29
    $region28: #{fc_block.1} parent=1 // pred_region
      %157 = vsyncadd [#allocation4], 0
      %s159 = sshll.u32 [#allocation3], 4
      %s160 = int_to_ptr.vmem [resolvable:$true] %s159
      %s161 = sshll.u32 %s4, 4
      %s162 = int_to_ptr.hbm [resolvable:$true] %s161
      %164 = dma.vmem_to_hbm [thread:$0]  %s160, 128, %s162, [#allocation4]
    $region29: #{fc_block.1} parent=1 // pred_fallthru
      _
    // Predicated region
    $region30: #{fc_block.1} parent=1 // pred_check
      _
    $region31: #{fc_block.1} parent=1 // pred_check_branch
      %166 = sbr.rel (0) target = $region33
    $region32: #{fc_block.1} parent=1 // pred_region
      %168 = dma.done [#allocation4], 128
    $region33: #{fc_block.1} parent=1 // pred_fallthru
      _
    %169 = vsyncpa [#allocation4], 1

</llo_original>
